<compile_context>
chip_gen: v7x
topology: tpu7x:2x2x1
jax: 0.10.0
libtpu: 0.0.40
codegen_flags: <defaults>
</compile_context>

<pallas_src>
import jax
import jax.numpy as jnp
from jax.experimental import pallas as pl
from jax.experimental.pallas import tpu as pltpu

ACTIONS = 2
HIDDEN = 20
SIZE = 11
LANE = 128        # lane-padded hidden width for layers 1 & 2
BIAS_ROWS = 8     # sublane-padded bias pack (rows 0..2 used)


def _round_up(n, m):
    return (n + m - 1) // m * m


def mlp_kernel(x_ref, w1_ref, w2_ref, w3_ref, b_ref, o_ref):
    """One batch tile of the fused MLP. Weight/bias refs are VMEM-resident across tiles."""
    cd = w1_ref.dtype                         # compute dtype (bf16 prod, f32 test-only)
    x = x_ref[...].astype(cd)                 # in-kernel cast: no wrapper pad/cast pass

    b1 = b_ref[0:1, :]                        # (1, 128) f32, zero beyond real width
    b2 = b_ref[1:2, :]
    b3 = b_ref[2:3, :][:, :ACTIONS]           # (1, ACTIONS) f32

    # Padded weight rows/columns are zero, so padded lanes of h1/h2 stay exactly zero.
    h1 = jnp.dot(x, w1_ref[...], preferred_element_type=jnp.float32) + b1
    h1 = jnp.maximum(h1, 0.0)                 # f32 VPU (v5e has no bf16 VPU path)

    h2 = jnp.dot(h1.astype(cd), w2_ref[...], preferred_element_type=jnp.float32) + b2
    h2 = jnp.maximum(h2, 0.0)

    out = jnp.dot(h2.astype(cd), w3_ref[...], preferred_element_type=jnp.float32) + b3
    o_ref[...] = out                          # (TB, ACTIONS) f32, no padded lanes written


def prepare_params(params, compute_dtype=jnp.bfloat16):
    """One-time packing: lane-padded weight slabs + a single packed bias buffer."""
    cd = compute_dtype
    w1p = jnp.zeros((SIZE, LANE), cd).at[:, :HIDDEN].set(params["w1"].astype(cd))
    w2p = jnp.zeros((LANE, LANE), cd).at[:HIDDEN, :HIDDEN].set(params["w2"].astype(cd))
    # Layer 3 kept narrow: only ACTIONS output lanes (review: kill 64x output writeback).
    w3p = jnp.zeros((LANE, ACTIONS), cd).at[:HIDDEN, :].set(params["w3"].astype(cd))
    bp = jnp.zeros((BIAS_ROWS, LANE), jnp.float32)
    bp = bp.at[0, :HIDDEN].set(params["b1"].reshape(-1))
    bp = bp.at[1, :HIDDEN].set(params["b2"].reshape(-1))
    bp = bp.at[2, :ACTIONS].set(params["b3"].reshape(-1))
    return w1p, w2p, w3p, bp


def _choose_tile(B, block_b):
    """Batch tile: always a multiple of 8; >=2 tiles when splittable (v7x dual-TC)."""
    block_b = max(8, _round_up(block_b, 8))      # harden against non-multiple-of-8 block_b
    if B > block_b:
        return block_b                           # grid >= 2 automatically
    if B > 8:
        return _round_up(pl.cdiv(B, 2), 8)       # split so both v7x TCs get a tile
    return 8


def mlp_forward(x, prepared, *, block_b=1024):
    """x: (B, SIZE) f32.  prepared: output of prepare_params.  Returns (B, ACTIONS) f32."""
    w1p, w2p, w3p, bp = prepared
    B = x.shape[0]
    tb = _choose_tile(B, block_b)
    grid = (pl.cdiv(B, tb),)                     # partial last block: writeback is clipped

    return pl.pallas_call(
        mlp_kernel,
        out_shape=jax.ShapeDtypeStruct((B, ACTIONS), jnp.float32),
        grid=grid,
        in_specs=[
            pl.BlockSpec((tb, SIZE), lambda i: (i, 0)),       # batch-tiled activations
            pl.BlockSpec((SIZE, LANE), lambda i: (0, 0)),     # weights: constant index map
            pl.BlockSpec((LANE, LANE), lambda i: (0, 0)),     #   -> DMA'd once, VMEM-resident
            pl.BlockSpec((LANE, ACTIONS), lambda i: (0, 0)),  # narrow layer-3 weights
            pl.BlockSpec((BIAS_ROWS, LANE), lambda i: (0, 0)),
        ],
        out_specs=pl.BlockSpec((tb, ACTIONS), lambda i: (i, 0)),  # narrow output block
        compiler_params=pltpu.CompilerParams(
            dimension_semantics=("parallel",),   # shards batch tiles across TCs on v7x
        ),
    )(x, w1p, w2p, w3p, bp)


def init_params(key):
    """Deterministic init mirroring PyTorch nn.Linear default (uniform +-1/sqrt(fan_in)).
    Weights stored transposed: (in_features, out_features); biases (1, out_features)."""
    ks = jax.random.split(key, 6)

    def linear(kw, kb, fan_in, fan_out):
        bound = 1.0 / jnp.sqrt(fan_in)
        w = jax.random.uniform(kw, (fan_in, fan_out), jnp.float32, -bound, bound)
        b = jax.random.uniform(kb, (1, fan_out), jnp.float32, -bound, bound)
        return w, b

    w1, b1 = linear(ks[0], ks[1], SIZE, HIDDEN)
    w2, b2 = linear(ks[2], ks[3], HIDDEN, HIDDEN)
    w3, b3 = linear(ks[4], ks[5], HIDDEN, ACTIONS)
    return dict(w1=w1, b1=b1, w2=w2, b2=b2, w3=w3, b3=b3)


def mlp_reference(x, p, compute_dtype=jnp.float32):
    """Pure-JAX reference in the same mixed precision as the kernel."""
    cd = compute_dtype
    h1 = jnp.maximum(
        jnp.dot(x.astype(cd), p["w1"].astype(cd), preferred_element_type=jnp.float32)
        + p["b1"], 0.0)
    h2 = jnp.maximum(
        jnp.dot(h1.astype(cd), p["w2"].astype(cd), preferred_element_type=jnp.float32)
        + p["b2"], 0.0)
    return (jnp.dot(h2.astype(cd), p["w3"].astype(cd), preferred_element_type=jnp.float32)
            + p["b3"])


if __name__ == "__main__":
    key = jax.random.PRNGKey(0)
    kx, kp, kx2 = jax.random.split(key, 3)

    params = init_params(kp)

    # --- small batch, bf16 production path (native MXU operands, f32 accumulation) ---
    B = 32
    x = jax.random.normal(kx, (B, SIZE), dtype=jnp.float32)
    out_bf16 = jax.block_until_ready(mlp_forward(x, prepare_params(params, jnp.bfloat16)))
    ref_f32 = mlp_reference(x, params, jnp.float32)
    ref_bf16 = mlp_reference(x, params, jnp.bfloat16)
    assert out_bf16.shape == (B, ACTIONS)
    assert jnp.allclose(out_bf16, ref_bf16, atol=2e-3, rtol=2e-3)
    assert jnp.allclose(out_bf16, ref_f32, atol=5e-2, rtol=5e-2)

    # --- f32-operand verification path (test-only; not the shipped config) ---
    out_f32 = jax.block_until_ready(mlp_forward(x, prepare_params(params, jnp.float32)))
    assert jnp.allclose(out_f32, ref_f32, atol=2e-2, rtol=2e-2)

    # --- larger, non-multiple-of-tile batch: exercises partial-block clipping + grid ---
    B2 = 100
    x2 = jax.random.normal(kx2, (B2, SIZE), dtype=jnp.float32)
    out2 = jax.block_until_ready(
        mlp_forward(x2, prepare_params(params, jnp.bfloat16), block_b=32))
    ref2 = mlp_reference(x2, params, jnp.bfloat16)
    assert out2.shape == (B2, ACTIONS)
    assert jnp.allclose(out2, ref2, atol=2e-3, rtol=2e-3)

    # --- non-multiple-of-8 block_b: exercises tile hardening (rounds to multiple of 8) ---
    out3 = jax.block_until_ready(
        mlp_forward(x2, prepare_params(params, jnp.bfloat16), block_b=20))
    assert jnp.allclose(out3, ref2, atol=2e-3, rtol=2e-3)

    print("KERNEL_OK")
</pallas_src>

<mosaic_0001>
module attributes {stable_mosaic.version = 11 : i64} {
  func.func @mlp_kernel(%arg0: i32, %arg1: memref<16x11xf32, #tpu.memory_space<vmem>>, %arg2: memref<11x128xbf16, #tpu.memory_space<vmem>>, %arg3: memref<128x128xbf16, #tpu.memory_space<vmem>>, %arg4: memref<128x2xbf16, #tpu.memory_space<vmem>>, %arg5: memref<8x128xf32, #tpu.memory_space<vmem>>, %arg6: memref<16x2xf32, #tpu.memory_space<vmem>>) attributes {dimension_semantics = [#tpu.dimension_semantics<parallel>], iteration_bounds = array<i64: 2>, scalar_prefetch = 0 : i64, scratch_operands = 0 : i64, tpu.core_type = #tpu.core_type<tc>, window_params = [{transform_indices = @transform_0, window_bounds = array<i64: 16, 11>}, {pipeline_mode = #tpu.pipeline_mode<synchronous>, transform_indices = @transform_1, window_bounds = array<i64: 11, 128>}, {pipeline_mode = #tpu.pipeline_mode<synchronous>, transform_indices = @transform_2, window_bounds = array<i64: 128, 128>}, {pipeline_mode = #tpu.pipeline_mode<synchronous>, transform_indices = @transform_3, window_bounds = array<i64: 128, 2>}, {pipeline_mode = #tpu.pipeline_mode<synchronous>, transform_indices = @transform_4, window_bounds = array<i64: 8, 128>}, {transform_indices = @transform_5, window_bounds = array<i64: 16, 2>}]} {
    %c0 = arith.constant 0 : index
    %c0_0 = arith.constant 0 : index
    %0 = vector.load %arg1[%c0, %c0_0] : memref<16x11xf32, #tpu.memory_space<vmem>>, vector<16x11xf32>
    %1 = arith.truncf %0 : vector<16x11xf32> to vector<16x11xbf16>
    %c0_1 = arith.constant 0 : index
    %c0_2 = arith.constant 0 : index
    %2 = vector.load %arg5[%c0_1, %c0_2] : memref<8x128xf32, #tpu.memory_space<vmem>>, vector<1x128xf32>
    %c1 = arith.constant 1 : index
    %c0_3 = arith.constant 0 : index
    %3 = vector.load %arg5[%c1, %c0_3] : memref<8x128xf32, #tpu.memory_space<vmem>>, vector<1x128xf32>
    %c2 = arith.constant 2 : index
    %c0_4 = arith.constant 0 : index
    %4 = vector.load %arg5[%c2, %c0_4] : memref<8x128xf32, #tpu.memory_space<vmem>>, vector<1x128xf32>
    %5 = vector.extract_strided_slice %4 {offsets = [0, 0], sizes = [1, 2], strides = [1, 1]} : vector<1x128xf32> to vector<1x2xf32>
    %c0_5 = arith.constant 0 : index
    %c0_6 = arith.constant 0 : index
    %6 = vector.load %arg2[%c0_5, %c0_6] : memref<11x128xbf16, #tpu.memory_space<vmem>>, vector<11x128xbf16>
    %cst = arith.constant dense<0.000000e+00> : vector<16x128xf32>
    %7 = tpu.matmul %1, %6, %cst {dimension_numbers = #tpu.dot_dimension_numbers<[1], [0], [0], [1], [0, 0, 1, 1], [], []>} : vector<16x11xbf16>, vector<11x128xbf16>, vector<16x128xf32> -> vector<16x128xf32>
    %8 = vector.broadcast %2 : vector<1x128xf32> to vector<16x128xf32>
    %9 = arith.addf %7, %8 : vector<16x128xf32>
    %cst_7 = arith.constant 0.000000e+00 : f32
    %10 = vector.broadcast %cst_7 : f32 to vector<16x128xf32>
    %11 = arith.maximumf %9, %10 : vector<16x128xf32>
    %12 = arith.truncf %11 : vector<16x128xf32> to vector<16x128xbf16>
    %c0_8 = arith.constant 0 : index
    %c0_9 = arith.constant 0 : index
    %13 = vector.load %arg3[%c0_8, %c0_9] : memref<128x128xbf16, #tpu.memory_space<vmem>>, vector<128x128xbf16>
    %cst_10 = arith.constant dense<0.000000e+00> : vector<16x128xf32>
    %14 = tpu.matmul %12, %13, %cst_10 {dimension_numbers = #tpu.dot_dimension_numbers<[1], [0], [0], [1], [0, 0, 1, 1], [], []>} : vector<16x128xbf16>, vector<128x128xbf16>, vector<16x128xf32> -> vector<16x128xf32>
    %15 = vector.broadcast %3 : vector<1x128xf32> to vector<16x128xf32>
    %16 = arith.addf %14, %15 : vector<16x128xf32>
    %cst_11 = arith.constant 0.000000e+00 : f32
    %17 = vector.broadcast %cst_11 : f32 to vector<16x128xf32>
    %18 = arith.maximumf %16, %17 : vector<16x128xf32>
    %19 = arith.truncf %18 : vector<16x128xf32> to vector<16x128xbf16>
    %c0_12 = arith.constant 0 : index
    %c0_13 = arith.constant 0 : index
    %20 = vector.load %arg4[%c0_12, %c0_13] : memref<128x2xbf16, #tpu.memory_space<vmem>>, vector<128x2xbf16>
    %cst_14 = arith.constant dense<0.000000e+00> : vector<16x2xf32>
    %21 = tpu.matmul %19, %20, %cst_14 {dimension_numbers = #tpu.dot_dimension_numbers<[1], [0], [0], [1], [0, 0, 1, 1], [], []>} : vector<16x128xbf16>, vector<128x2xbf16>, vector<16x2xf32> -> vector<16x2xf32>
    %22 = vector.broadcast %5 : vector<1x2xf32> to vector<16x2xf32>
    %23 = arith.addf %21, %22 : vector<16x2xf32>
    %c0_15 = arith.constant 0 : index
    %c0_16 = arith.constant 0 : index
    %24 = vector.load %arg6[%c0_15, %c0_16] : memref<16x2xf32, #tpu.memory_space<vmem>>, vector<16x2xf32>
    tpu.vector_store %arg6[%c0_15, %c0_16], %23 {strides = array<i32>} : memref<16x2xf32, #tpu.memory_space<vmem>>, vector<16x2xf32>,
    return
  }
  func.func @transform_0(%arg0: i32) -> (i32, i32) {
    %c0_i32 = arith.constant 0 : i32
    %c0_i32_0 = arith.constant 0 : i32
    return %arg0, %c0_i32 : i32, i32
  }
  func.func @transform_1(%arg0: i32) -> (i32, i32) {
    %c0_i32 = arith.constant 0 : i32
    %c0_i32_0 = arith.constant 0 : i32
    %c0_i32_1 = arith.constant 0 : i32
    return %c0_i32, %c0_i32_0 : i32, i32
  }
  func.func @transform_2(%arg0: i32) -> (i32, i32) {
    %c0_i32 = arith.constant 0 : i32
    %c0_i32_0 = arith.constant 0 : i32
    %c0_i32_1 = arith.constant 0 : i32
    return %c0_i32, %c0_i32_0 : i32, i32
  }
  func.func @transform_3(%arg0: i32) -> (i32, i32) {
    %c0_i32 = arith.constant 0 : i32
    %c0_i32_0 = arith.constant 0 : i32
    %c0_i32_1 = arith.constant 0 : i32
    return %c0_i32, %c0_i32_0 : i32, i32
  }
  func.func @transform_4(%arg0: i32) -> (i32, i32) {
    %c0_i32 = arith.constant 0 : i32
    %c0_i32_0 = arith.constant 0 : i32
    %c0_i32_1 = arith.constant 0 : i32
    return %c0_i32, %c0_i32_0 : i32, i32
  }
  func.func @transform_5(%arg0: i32) -> (i32, i32) {
    %c0_i32 = arith.constant 0 : i32
    %c0_i32_0 = arith.constant 0 : i32
    return %arg0, %c0_i32 : i32, i32
  }
}

</mosaic_0001>

<llo_original>
// kernel: tpu_custom_call.1
$region0: #{tpu_custom_call.1}
  #allocation0 [shape = 'u32[]', space=smem, size = 0x4, offset = 0x4, fixed_abs, tag = 'smem constant byte address 0x4 - core index']
  #allocation1 [shape = 'u32[144,128]{1,0:T(1,128)}', space=vmem, size = 0x12000, scoped, tag = 'internal scratch']
  %s0 = inlined_call_operand.vmem [shape: f32[32,11], index: 0, kind: input, shape index: {}]
  %s1 = inlined_call_operand.vmem [shape: bf16[11,128], index: 1, kind: input, shape index: {}]
  %s2 = inlined_call_operand.vmem [shape: bf16[128,128], index: 2, kind: input, shape index: {}]
  %s3 = inlined_call_operand.vmem [shape: bf16[128,2], index: 3, kind: input, shape index: {}]
  %s4 = inlined_call_operand.vmem [shape: f32[8,128], index: 4, kind: input, shape index: {}]
  %s5 = inlined_call_operand.vmem [shape: f32[32,2], index: 5, kind: output, shape index: {}]
  %s6 = sld [smem:[#allocation0]]
  $region53: #{tpu_custom_call.1} parent=0
    _
  %s8 = ssub.s32 1, %s6
  %s9 = scalar_select 0, %s8, %s6
  loop: start=0, step=1, limit=4
  $region2: #{tpu_custom_call.1} parent=0 // loop_pre_header
    _
  $region3: #{tpu_custom_call.1} parent=0 // loop_header
    %s11 = sphi 0, %s15
    %p12 = scmp.ge.s32.totalorder %s11, 4
    %s21 = sphi 0, %s23
    %s24 = sphi 0, %s21
    %s25 = sphi 0, %s24
    %s41 = sphi 0, %s25
    %s45 = sphi 0, %s45
    %s47 = sphi 0, %s45
    %s48 = sphi 0, %s47
    %s62 = sphi 0, %s48
    %s66 = sphi 0, %s66
    %s68 = sphi 0, %s66
    %s69 = sphi 0, %s68
    %s83 = sphi 0, %s69
    %s87 = sphi 0, %s87
    %s89 = sphi 0, %s87
    %s90 = sphi 0, %s89
    %s104 = sphi 0, %s90
    %s108 = sphi 0, %s108
    %s110 = sphi 0, %s108
    %s111 = sphi 0, %s110
    %s125 = sphi 0, %s111
    %s131 = sphi 0, %s133
    %s134 = sphi 0, %s131
    %s135 = sphi 0, %s134
    %s151 = sphi 0, %s135
  $region4: #{tpu_custom_call.1} parent=0 // loop_header_branch
    %14 = sbr.rel (%p12) target = $region8
  $region5: #{tpu_custom_call.1} parent=0 // loop_body
    %s16 = ssub.s32 %s11, 1
    %s17 = ssub.s32 %s11, 2
    %s18 = sadd.s32 %s11, 1
    %s19 = ssub.s32 %s11, %s18
    %p20 = scmp.eq.s32.totalorder %s19, 0
    %s22 = sadd.s32 %s21, 1
    %s23 = scalar_select %p20, %s21, %s22
    %p26 = pneg %p20
    %p27 = scmp.eq.s32.totalorder %s11, 1
    %p28 = por %p26, %p27
    %p29 = scmp.ne.s32.totalorder %s21, %s24
    %p30 = scmp.eq.s32.totalorder %s11, 0
    %p31 = por %p29, %p30
    %p32 = scmp.ne.s32.totalorder %s21, %s24
    %p33 = scmp.eq.s32.totalorder %s16, 1
    %p34 = por %p32, %p33
    %p35 = scmp.ne.s32.totalorder %s24, %s25
    %p36 = scmp.eq.s32.totalorder %s16, 0
    %p37 = por %p35, %p36
    %p38 = scmp.ne.s32.totalorder %s24, %s25
    %p39 = scmp.eq.s32.totalorder %s17, 1
    %p40 = por %p38, %p39
    %p42 = scmp.ne.s32.totalorder %s25, %s41
    %p43 = scmp.eq.s32.totalorder %s17, 0
    %p44 = por %p42, %p43
    %s46 = sadd.s32 %s45, 1
    %p49 = scmp.eq.s32.totalorder %s11, 1
    %p50 = scmp.ne.s32.totalorder %s45, %s47
    %p51 = scmp.eq.s32.totalorder %s11, 0
    %p52 = por %p50, %p51
    %p53 = scmp.ne.s32.totalorder %s45, %s47
    %p54 = scmp.eq.s32.totalorder %s16, 1
    %p55 = por %p53, %p54
    %p56 = scmp.ne.s32.totalorder %s47, %s48
    %p57 = scmp.eq.s32.totalorder %s16, 0
    %p58 = por %p56, %p57
    %p59 = scmp.ne.s32.totalorder %s47, %s48
    %p60 = scmp.eq.s32.totalorder %s17, 1
    %p61 = por %p59, %p60
    %p63 = scmp.ne.s32.totalorder %s48, %s62
    %p64 = scmp.eq.s32.totalorder %s17, 0
    %p65 = por %p63, %p64
    %s67 = sadd.s32 %s66, 1
    %p70 = scmp.eq.s32.totalorder %s11, 1
    %p71 = scmp.ne.s32.totalorder %s66, %s68
    %p72 = scmp.eq.s32.totalorder %s11, 0
    %p73 = por %p71, %p72
    %p74 = scmp.ne.s32.totalorder %s66, %s68
    %p75 = scmp.eq.s32.totalorder %s16, 1
    %p76 = por %p74, %p75
    %p77 = scmp.ne.s32.totalorder %s68, %s69
    %p78 = scmp.eq.s32.totalorder %s16, 0
    %p79 = por %p77, %p78
    %p80 = scmp.ne.s32.totalorder %s68, %s69
    %p81 = scmp.eq.s32.totalorder %s17, 1
    %p82 = por %p80, %p81
    %p84 = scmp.ne.s32.totalorder %s69, %s83
    %p85 = scmp.eq.s32.totalorder %s17, 0
    %p86 = por %p84, %p85
    %s88 = sadd.s32 %s87, 1
    %p91 = scmp.eq.s32.totalorder %s11, 1
    %p92 = scmp.ne.s32.totalorder %s87, %s89
    %p93 = scmp.eq.s32.totalorder %s11, 0
    %p94 = por %p92, %p93
    %p95 = scmp.ne.s32.totalorder %s87, %s89
    %p96 = scmp.eq.s32.totalorder %s16, 1
    %p97 = por %p95, %p96
    %p98 = scmp.ne.s32.totalorder %s89, %s90
    %p99 = scmp.eq.s32.totalorder %s16, 0
    %p100 = por %p98, %p99
    %p101 = scmp.ne.s32.totalorder %s89, %s90
    %p102 = scmp.eq.s32.totalorder %s17, 1
    %p103 = por %p101, %p102
    %p105 = scmp.ne.s32.totalorder %s90, %s104
    %p106 = scmp.eq.s32.totalorder %s17, 0
    %p107 = por %p105, %p106
    %s109 = sadd.s32 %s108, 1
    %p112 = scmp.eq.s32.totalorder %s11, 1
    %p113 = scmp.ne.s32.totalorder %s108, %s110
    %p114 = scmp.eq.s32.totalorder %s11, 0
    %p115 = por %p113, %p114
    %p116 = scmp.ne.s32.totalorder %s108, %s110
    %p117 = scmp.eq.s32.totalorder %s16, 1
    %p118 = por %p116, %p117
    %p119 = scmp.ne.s32.totalorder %s110, %s111
    %p120 = scmp.eq.s32.totalorder %s16, 0
    %p121 = por %p119, %p120
    %p122 = scmp.ne.s32.totalorder %s110, %s111
    %p123 = scmp.eq.s32.totalorder %s17, 1
    %p124 = por %p122, %p123
    %p126 = scmp.ne.s32.totalorder %s111, %s125
    %p127 = scmp.eq.s32.totalorder %s17, 0
    %p128 = por %p126, %p127
    %s129 = ssub.s32 %s11, %s18
    %p130 = scmp.eq.s32.totalorder %s129, 0
    %s132 = sadd.s32 %s131, 1
    %s133 = scalar_select %p130, %s131, %s132
    %p136 = pneg %p130
    %p137 = scmp.eq.s32.totalorder %s11, 1
    %p138 = por %p136, %p137
    %p139 = scmp.ne.s32.totalorder %s131, %s134
    %p140 = scmp.eq.s32.totalorder %s11, 0
    %p141 = por %p139, %p140
    %p142 = scmp.ne.s32.totalorder %s131, %s134
    %p143 = scmp.eq.s32.totalorder %s16, 1
    %p144 = por %p142, %p143
    %p145 = scmp.ne.s32.totalorder %s134, %s135
    %p146 = scmp.eq.s32.totalorder %s16, 0
    %p147 = por %p145, %p146
    %p148 = scmp.ne.s32.totalorder %s134, %s135
    %p149 = scmp.eq.s32.totalorder %s17, 1
    %p150 = por %p148, %p149
    %p152 = scmp.ne.s32.totalorder %s135, %s151
    %p153 = scmp.eq.s32.totalorder %s17, 0
    %p154 = por %p152, %p153
    %p155 = scmp.le.s32.totalorder 1, %s11
    %p156 = scmp.lt.s32.totalorder %s11, 3
    %p157 = pnand %p155, %p156
    %p158 = pneg %p157
    // Predicated region
    $region9: #{tpu_custom_call.1} parent=5 // pred_check
      _
    $region10: #{tpu_custom_call.1} parent=5 // pred_check_branch
      %160 = sbr.rel (%p157) target = $region12
    $region11: #{tpu_custom_call.1} parent=5 // pred_region
      %s161 = ssub.s32 %s11, 1
      // Predicated region
      $region13: #{tpu_custom_call.1} parent=11 // pred_check
        %p162 = pneg %p58
      $region14: #{tpu_custom_call.1} parent=11 // pred_check_branch
        %164 = sbr.rel (%p162) target = $region16
      $region15: #{tpu_custom_call.1} parent=11 // pred_region
        _
      $region16: #{tpu_custom_call.1} parent=11 // pred_fallthru
        _
      // Predicated region
      $region17: #{tpu_custom_call.1} parent=11 // pred_check
        %p165 = pneg %p79
      $region18: #{tpu_custom_call.1} parent=11 // pred_check_branch
        %167 = sbr.rel (%p165) target = $region20
      $region19: #{tpu_custom_call.1} parent=11 // pred_region
        _
      $region20: #{tpu_custom_call.1} parent=11 // pred_fallthru
        _
      // Predicated region
      $region21: #{tpu_custom_call.1} parent=11 // pred_check
        %p168 = pneg %p100
      $region22: #{tpu_custom_call.1} parent=11 // pred_check_branch
        %170 = sbr.rel (%p168) target = $region24
      $region23: #{tpu_custom_call.1} parent=11 // pred_region
        _
      $region24: #{tpu_custom_call.1} parent=11 // pred_fallthru
        _
      // Predicated region
      $region25: #{tpu_custom_call.1} parent=11 // pred_check
        %p171 = pneg %p121
      $region26: #{tpu_custom_call.1} parent=11 // pred_check_branch
        %173 = sbr.rel (%p171) target = $region28
      $region27: #{tpu_custom_call.1} parent=11 // pred_region
        _
      $region28: #{tpu_custom_call.1} parent=11 // pred_fallthru
        _
    $region12: #{tpu_custom_call.1} parent=5 // pred_fallthru
      _
    %p174 = scmp.lt.s32.totalorder %s11, 2
    // Predicated region
    $region29: #{tpu_custom_call.1} parent=5 // pred_check
      %p175 = pneg %p174
    $region30: #{tpu_custom_call.1} parent=5 // pred_check_branch
      %177 = sbr.rel (%p175) target = $region32
    $region31: #{tpu_custom_call.1} parent=5 // pred_region
      // Predicated region
      $region33: #{tpu_custom_call.1} parent=31 // pred_check
        %p178 = pneg %p31
      $region34: #{tpu_custom_call.1} parent=31 // pred_check_branch
        %180 = sbr.rel (%p178) target = $region36
      $region35: #{tpu_custom_call.1} parent=31 // pred_region
        %s181 = smul.u32 2, %s11
        %p182 = scmp.lt.s32.totalorder %s181, 3
        %s183 = scalar_select %p182, %s181, 3
        %s184 = smul.addr %s183, 8
        %s185 = scalar_lea.vmem %s0, %s184
        %s186 = smul.u32 2, %s11
      $region36: #{tpu_custom_call.1} parent=31 // pred_fallthru
        _
    $region32: #{tpu_custom_call.1} parent=5 // pred_fallthru
      _
    %p187 = scmp.le.s32.totalorder 1, %s11
    %p188 = scmp.lt.s32.totalorder %s11, 3
    %p189 = pnand %p187, %p188
    %p190 = pneg %p189
    // Predicated region
    $region37: #{tpu_custom_call.1} parent=5 // pred_check
      _
    $region38: #{tpu_custom_call.1} parent=5 // pred_check_branch
      %192 = sbr.rel (%p189) target = $region40
    $region39: #{tpu_custom_call.1} parent=5 // pred_region
      %s193 = ssub.s32 %s11, 1
      %s194 = smul.u32 2, %s16
      %p195 = scmp.lt.s32.totalorder %s194, 3
      %s196 = scalar_select %p195, %s194, 3
      %s197 = smul.addr %s196, 8
      %s198 = scalar_lea.vmem %s0, %s197
      %p199 = pneg %p37
      %p200 = pneg %p34
      %p201 = pneg %p58
      %p202 = pneg %p55
      %p203 = pneg %p79
      %p204 = pneg %p76
      %p205 = pneg %p100
      %p206 = pneg %p97
      %p207 = pneg %p121
      %p208 = pneg %p118
      %p209 = pneg %p147
      %p210 = pneg %p144
      %s211 = smul.u32 2, %s16
      %p212 = scmp.lt.s32.totalorder %s211, 3
      %s213 = scalar_select %p212, %s211, 3
      %s214 = smul.addr %s213, 8
      %s215 = scalar_lea.vmem %s5, %s214
      %s216 = smul.u32 2, %s16
      %p217 = scmp.lt.s32.totalorder %s216, 3
      %s218 = scalar_select %p217, %s216, 3
      %s219 = smul.addr %s218, 8
      %s220 = scalar_lea.vmem %s0, %s219
      %s221 = smul.u32 2, %s16
      %s222 = smul.u32 2, %s16
      %p223 = scmp.lt.s32.totalorder %s222, 3
      %s224 = scalar_select %p223, %s222, 3
      %s225 = smul.addr %s224, 8
      %s226 = scalar_lea.vmem %s5, %s225
      %s227 = smul.u32 2, %s16
      %v229 = vld [vmem:[%s220] sm:$0xff]
      %v230 = vld [vmem:[%s220 + $0x8] sm:$0xff]
      %v231 = vpack.c.bf16 %v230, %v229
      %v232 = vld [vmem:[%s4] sm:$0x1]
      %v233 = vld [vmem:[%s4 + $0x1] sm:$0x1]
      %v234 = vld [vmem:[%s4 + $0x2] sm:$0x1]
      %v235 = vld [vmem:[%s1] sm:$0xf]
      %v236 = vld [vmem:[%s1 + $0x4] sm:$0x3]
      %v237 = vlaneseq
      %v238 = vshrl.u32 %v237, 7
      %v239 = vsub.s32 0, %v238
      %v240 = vrot.slane %v232, %v239
      %v243 = vunpack.c.l.b16 %v235
      %v244 = vunpack.c.l.b16 %v236
      %v245 = vpack.c.b16 %v244, %v243
      %vm246 = vcmask 89088
      %v248 = vsel %vm246, %v231, 0
      %vm250 = vcmask 1044480
      %vm251 = vcmask 1045504
      %v252 = vsel %vm250, 4294967295, 65535
      %v253 = vsel %vm251, %v252, 0
      %v255 = vand.u32 %v245, %v253
      %257 = vmatprep.subr.bf16.mxu0 0
      %258 = vmatpush1.bf16.msra.mxu0 %v255
      %259 = vmatprep.subr.bf16.mxu0 0
      %260 = vmatpush1.bf16.msra.mxu0 0
      %261 = vmatprep.subr.bf16.mxu0 0
      %262 = vmatpush1.bf16.msra.mxu0 0
      %263 = vmatprep.subr.bf16.mxu0 0
      %264 = vmatpush1.bf16.msra.mxu0 0
      %265 = vmatprep.subr.bf16.mxu0 0
      %266 = vmatpush1.bf16.msra.mxu0 0
      %267 = vmatprep.subr.bf16.mxu0 0
      %268 = vmatpush1.bf16.msra.mxu0 0
      %269 = vmatprep.subr.bf16.mxu0 0
      %270 = vmatpush1.bf16.msra.mxu0 0
      %271 = vmatprep.subr.bf16.mxu0 0
      %272 = vmatpush1.bf16.msra.mxu0 0
      %273 = vmatprep.subr.bf16.mxu0 0
      %274 = vmatpush1.bf16.msra.mxu0 0
      %275 = vmatprep.subr.bf16.mxu0 0
      %276 = vmatpush1.bf16.msra.mxu0 0
      %277 = vmatprep.subr.bf16.mxu0 0
      %278 = vmatpush1.bf16.msra.mxu0 0
      %279 = vmatprep.subr.bf16.mxu0 0
      %280 = vmatpush1.bf16.msra.mxu0 0
      %281 = vmatprep.subr.bf16.mxu0 0
      %282 = vmatpush1.bf16.msra.mxu0 0
      %283 = vmatprep.subr.bf16.mxu0 0
      %284 = vmatpush1.bf16.msra.mxu0 0
      %285 = vmatprep.subr.bf16.mxu0 0
      %286 = vmatpush1.bf16.msra.mxu0 0
      %287 = vmatprep.subr.bf16.mxu0 0
      %288 = vmatpush1.bf16.msra.mxu0 0
      %289 = vmatprep.mubr.bf16.mxu0 0
      %290 = vmatmul.mubr.bf16.gmra.mrb[0].mxu0 %v248
      %v291 = vpop.f32.mrb[0].mxu0
      %v292 = vadd.f32 %v240, %v291
      %v293 = vpop.f32.mrb[0].mxu0
      %v294 = vpop.f32.mrb[0].mxu0
      %v295 = vadd.f32 %v240, %v294
      %v296 = vpop.f32.mrb[0].mxu0
      %297 = vdwg.mxu0
      %v298 = vmax.f32 %v292, 0.0
      %v299 = vmax.f32 %v295, 0.0
      %v300 = vpack.c.bf16 %v299, %v298
      %v301 = vld [vmem:[%s2] sm:$0xf]
      %v302 = vld [vmem:[%s2 + $0x4] sm:$0xf]
      %v303 = vld [vmem:[%s2 + $0x8] sm:$0xf]
      %v304 = vld [vmem:[%s2 + $0xc] sm:$0xf]
      %v305 = vld [vmem:[%s2 + $0x10] sm:$0xf]
      %v306 = vld [vmem:[%s2 + $0x14] sm:$0xf]
      %v307 = vld [vmem:[%s2 + $0x18] sm:$0xf]
      %v308 = vld [vmem:[%s2 + $0x1c] sm:$0xf]
      %v309 = vld [vmem:[%s2 + $0x20] sm:$0xf]
      %v310 = vld [vmem:[%s2 + $0x24] sm:$0xf]
      %v311 = vld [vmem:[%s2 + $0x28] sm:$0xf]
      %v312 = vld [vmem:[%s2 + $0x2c] sm:$0xf]
      %v313 = vld [vmem:[%s2 + $0x30] sm:$0xf]
      %v314 = vld [vmem:[%s2 + $0x34] sm:$0xf]
      %v315 = vld [vmem:[%s2 + $0x38] sm:$0xf]
      %v316 = vld [vmem:[%s2 + $0x3c] sm:$0xf]
      %v317 = vlaneseq
      %v318 = vshrl.u32 %v317, 7
      %v319 = vsub.s32 0, %v318
      %v320 = vrot.slane %v233, %v319
      %v337 = vunpack.c.l.b16 %v301
      %v338 = vunpack.c.l.b16 %v302
      %v339 = vunpack.c.l.b16 %v303
      %v340 = vunpack.c.l.b16 %v304
      %v341 = vunpack.c.l.b16 %v305
      %v342 = vunpack.c.l.b16 %v306
      %v343 = vunpack.c.l.b16 %v307
      %v344 = vunpack.c.l.b16 %v308
      %v345 = vunpack.c.l.b16 %v309
      %v346 = vunpack.c.l.b16 %v310
      %v347 = vunpack.c.l.b16 %v311
      %v348 = vunpack.c.l.b16 %v312
      %v349 = vunpack.c.l.b16 %v313
      %v350 = vunpack.c.l.b16 %v314
      %v351 = vunpack.c.l.b16 %v315
      %v352 = vunpack.c.l.b16 %v316
      %v353 = vpack.c.b16 %v338, %v337
      %v354 = vpack.c.b16 %v340, %v339
      %v355 = vpack.c.b16 %v342, %v341
      %v356 = vpack.c.b16 %v344, %v343
      %v357 = vpack.c.b16 %v346, %v345
      %v358 = vpack.c.b16 %v348, %v347
      %v359 = vpack.c.b16 %v350, %v349
      %v360 = vpack.c.b16 %v352, %v351
      %369 = vmatprep.subr.bf16.mxu0 0
      %370 = vmatpush1.bf16.msra.mxu0 %v353
      %371 = vmatprep.subr.bf16.mxu0 0
      %372 = vmatpush1.bf16.msra.mxu0 %v354
      %373 = vmatprep.subr.bf16.mxu0 0
      %374 = vmatpush1.bf16.msra.mxu0 %v355
      %375 = vmatprep.subr.bf16.mxu0 0
      %376 = vmatpush1.bf16.msra.mxu0 %v356
      %377 = vmatprep.subr.bf16.mxu0 0
      %378 = vmatpush1.bf16.msra.mxu0 %v357
      %379 = vmatprep.subr.bf16.mxu0 0
      %380 = vmatpush1.bf16.msra.mxu0 %v358
      %381 = vmatprep.subr.bf16.mxu0 0
      %382 = vmatpush1.bf16.msra.mxu0 %v359
      %383 = vmatprep.subr.bf16.mxu0 0
      %384 = vmatpush1.bf16.msra.mxu0 %v360
      %385 = vmatprep.subr.bf16.mxu0 0
      %386 = vmatpush1.bf16.msra.mxu0 0
      %387 = vmatprep.subr.bf16.mxu0 0
      %388 = vmatpush1.bf16.msra.mxu0 0
      %389 = vmatprep.subr.bf16.mxu0 0
      %390 = vmatpush1.bf16.msra.mxu0 0
      %391 = vmatprep.subr.bf16.mxu0 0
      %392 = vmatpush1.bf16.msra.mxu0 0
      %393 = vmatprep.subr.bf16.mxu0 0
      %394 = vmatpush1.bf16.msra.mxu0 0
      %395 = vmatprep.subr.bf16.mxu0 0
      %396 = vmatpush1.bf16.msra.mxu0 0
      %397 = vmatprep.subr.bf16.mxu0 0
      %398 = vmatpush1.bf16.msra.mxu0 0
      %399 = vmatprep.subr.bf16.mxu0 0
      %400 = vmatpush1.bf16.msra.mxu0 0
      %401 = vmatprep.mubr.bf16.mxu0 0
      %402 = vmatmul.mubr.bf16.gmra.mrb[0].mxu0 %v300
      %v403 = vpop.f32.mrb[0].mxu0
      %v404 = vadd.f32 %v320, %v403
      %v405 = vpop.f32.mrb[0].mxu0
      %v406 = vpop.f32.mrb[0].mxu0
      %v407 = vadd.f32 %v320, %v406
      %v408 = vpop.f32.mrb[0].mxu0
      %409 = vdwg.mxu0
      %v410 = vmax.f32 %v404, 0.0
      %v411 = vmax.f32 %v407, 0.0
      %v412 = vpack.c.bf16 %v411, %v410
      %v413 = vld [vmem:[%s3] sm:$0xf]
      %v414 = vld [vmem:[%s3 + $0x4] sm:$0xf]
      %v415 = vld [vmem:[%s3 + $0x8] sm:$0xf]
      %v416 = vld [vmem:[%s3 + $0xc] sm:$0xf]
      %v417 = vld [vmem:[%s3 + $0x10] sm:$0xf]
      %v418 = vld [vmem:[%s3 + $0x14] sm:$0xf]
      %v419 = vld [vmem:[%s3 + $0x18] sm:$0xf]
      %v420 = vld [vmem:[%s3 + $0x1c] sm:$0xf]
      %v421 = vld [vmem:[%s3 + $0x20] sm:$0xf]
      %v422 = vld [vmem:[%s3 + $0x24] sm:$0xf]
      %v423 = vld [vmem:[%s3 + $0x28] sm:$0xf]
      %v424 = vld [vmem:[%s3 + $0x2c] sm:$0xf]
      %v425 = vld [vmem:[%s3 + $0x30] sm:$0xf]
      %v426 = vld [vmem:[%s3 + $0x34] sm:$0xf]
      %v427 = vld [vmem:[%s3 + $0x38] sm:$0xf]
      %v428 = vld [vmem:[%s3 + $0x3c] sm:$0xf]
      %v429 = vlaneseq
      %v430 = vshrl.u32 %v429, 7
      %v431 = vsub.s32 0, %v430
      %v432 = vrot.slane %v234, %v431
      %v449 = vunpack.c.l.b16 %v413
      %v450 = vunpack.c.l.b16 %v414
      %v451 = vunpack.c.l.b16 %v415
      %v452 = vunpack.c.l.b16 %v416
      %v453 = vunpack.c.l.b16 %v417
      %v454 = vunpack.c.l.b16 %v418
      %v455 = vunpack.c.l.b16 %v419
      %v456 = vunpack.c.l.b16 %v420
      %v457 = vunpack.c.l.b16 %v421
      %v458 = vunpack.c.l.b16 %v422
      %v459 = vunpack.c.l.b16 %v423
      %v460 = vunpack.c.l.b16 %v424
      %v461 = vunpack.c.l.b16 %v425
      %v462 = vunpack.c.l.b16 %v426
      %v463 = vunpack.c.l.b16 %v427
      %v464 = vunpack.c.l.b16 %v428
      %v465 = vpack.c.b16 %v450, %v449
      %v466 = vpack.c.b16 %v452, %v451
      %v467 = vpack.c.b16 %v454, %v453
      %v468 = vpack.c.b16 %v456, %v455
      %v469 = vpack.c.b16 %v458, %v457
      %v470 = vpack.c.b16 %v460, %v459
      %v471 = vpack.c.b16 %v462, %v461
      %v472 = vpack.c.b16 %v464, %v463
      %481 = vmatprep.subr.bf16.mxu0 0
      %482 = vmatpush1.bf16.msra.mxu0 %v465
      %483 = vmatprep.subr.bf16.mxu0 0
      %484 = vmatpush1.bf16.msra.mxu0 %v466
      %485 = vmatprep.subr.bf16.mxu0 0
      %486 = vmatpush1.bf16.msra.mxu0 %v467
      %487 = vmatprep.subr.bf16.mxu0 0
      %488 = vmatpush1.bf16.msra.mxu0 %v468
      %489 = vmatprep.subr.bf16.mxu0 0
      %490 = vmatpush1.bf16.msra.mxu0 %v469
      %491 = vmatprep.subr.bf16.mxu0 0
      %492 = vmatpush1.bf16.msra.mxu0 %v470
      %493 = vmatprep.subr.bf16.mxu0 0
      %494 = vmatpush1.bf16.msra.mxu0 %v471
      %495 = vmatprep.subr.bf16.mxu0 0
      %496 = vmatpush1.bf16.msra.mxu0 %v472
      %497 = vmatprep.subr.bf16.mxu0 0
      %498 = vmatpush1.bf16.msra.mxu0 0
      %499 = vmatprep.subr.bf16.mxu0 0
      %500 = vmatpush1.bf16.msra.mxu0 0
      %501 = vmatprep.subr.bf16.mxu0 0
      %502 = vmatpush1.bf16.msra.mxu0 0
      %503 = vmatprep.subr.bf16.mxu0 0
      %504 = vmatpush1.bf16.msra.mxu0 0
      %505 = vmatprep.subr.bf16.mxu0 0
      %506 = vmatpush1.bf16.msra.mxu0 0
      %507 = vmatprep.subr.bf16.mxu0 0
      %508 = vmatpush1.bf16.msra.mxu0 0
      %509 = vmatprep.subr.bf16.mxu0 0
      %510 = vmatpush1.bf16.msra.mxu0 0
      %511 = vmatprep.subr.bf16.mxu0 0
      %512 = vmatpush1.bf16.msra.mxu0 0
      %513 = vmatprep.mubr.bf16.mxu0 0
      %514 = vmatmul.mubr.bf16.gmra.mrb[0].mxu0 %v412
      %v515 = vpop.f32.mrb[0].mxu0
      %v516 = vadd.f32 %v432, %v515
      %v517 = vpop.f32.mrb[0].mxu0
      %v518 = vpop.f32.mrb[0].mxu0
      %v519 = vadd.f32 %v432, %v518
      %v520 = vpop.f32.mrb[0].mxu0
      %521 = vdwg.mxu0
      %vm522 = vcmask 15360
      %523 = vst.msk [vmem:[%s226] sm:$0xff] %vm522, %v516
      %524 = vst.msk [vmem:[%s226 + $0x8] sm:$0xff] %vm522, %v519
      %s525 = smul.u32 2, %s16
      %p526 = scmp.lt.s32.totalorder %s525, 3
      %s527 = scalar_select %p526, %s525, 3
      %s528 = smul.addr %s527, 8
      %s529 = scalar_lea.vmem %s5, %s528
      // Predicated region
      $region41: #{tpu_custom_call.1} parent=39 // pred_check
        %p530 = pneg %p144
      $region42: #{tpu_custom_call.1} parent=39 // pred_check_branch
        %532 = sbr.rel (%p530) target = $region44
      $region43: #{tpu_custom_call.1} parent=39 // pred_region
        %s533 = smul.u32 2, %s16
      $region44: #{tpu_custom_call.1} parent=39 // pred_fallthru
        _
    $region40: #{tpu_custom_call.1} parent=5 // pred_fallthru
      _
    %p534 = scmp.le.s32.totalorder 2, %s11
    // Predicated region
    $region45: #{tpu_custom_call.1} parent=5 // pred_check
      %p535 = pneg %p534
    $region46: #{tpu_custom_call.1} parent=5 // pred_check_branch
      %537 = sbr.rel (%p535) target = $region48
    $region47: #{tpu_custom_call.1} parent=5 // pred_region
      %s538 = ssub.s32 %s11, 2
      // Predicated region
      $region49: #{tpu_custom_call.1} parent=47 // pred_check
        %p539 = pneg %p150
      $region50: #{tpu_custom_call.1} parent=47 // pred_check_branch
        %541 = sbr.rel (%p539) target = $region52
      $region51: #{tpu_custom_call.1} parent=47 // pred_region
        %s542 = smul.u32 2, %s17
        %p543 = scmp.lt.s32.totalorder %s542, 3
        %s544 = scalar_select %p543, %s542, 3
        %s545 = smul.addr %s544, 8
        %s546 = scalar_lea.vmem %s5, %s545
      $region52: #{tpu_custom_call.1} parent=47 // pred_fallthru
        _
    $region48: #{tpu_custom_call.1} parent=5 // pred_fallthru
      _
  $region6: #{tpu_custom_call.1} parent=0 // loop_footer
    %s15 = sadd.s32 1, %s11
  $region7: #{tpu_custom_call.1} parent=0 // loop_footer_branch
    %10 = sbr.rel target = $region3
  $region8: #{tpu_custom_call.1} parent=0 // loop_exit
    _

</llo_original>
